<compile_context>
chip_gen: v6e
topology: v6e:2x2x1
jax: 0.10.0
libtpu: 0.0.40
codegen_flags: <defaults>
</compile_context>

<pallas_src>
import functools

import jax
import jax.numpy as jnp
from jax import lax
from jax.experimental import pallas as pl
from jax.experimental.pallas import tpu as pltpu


def mha_flash_kernel(qp_ref, kp_ref, vp_ref, qres_ref,
                     wfc_ref, bfc_ref, gamma_ref, beta_ref,
                     out_ref,
                     m_ref, l_ref, acc_ref,
                     *, eps, k_len, tk, kv_padded):
    ki = pl.program_id(1)

    # ---- first kv step for this q tile: init online-softmax state
    @pl.when(ki == 0)
    def _init():
        m_ref[...] = jnp.full_like(m_ref, -1e30)
        l_ref[...] = jnp.zeros_like(l_ref)
        acc_ref[...] = jnp.zeros_like(acc_ref)

    # ---- head-batched scores on the MXU: (H, tq, tk), f32 accumulation
    s = jnp.einsum("hqd,hkd->hqk", qp_ref[...], kp_ref[...],
                   preferred_element_type=jnp.float32)

    if kv_padded:
        col = ki * tk + lax.broadcasted_iota(jnp.int32, s.shape, 2)
        s = jnp.where(col < k_len, s, -1e30)

    # ---- online softmax update (state lives in VMEM scratch across kv steps)
    m_prev = m_ref[...]                                         # (H, tq, 1)
    m_new = jnp.maximum(m_prev, jnp.max(s, axis=-1, keepdims=True))
    alpha = jnp.exp(m_prev - m_new)
    p = jnp.exp(s - m_new)                                      # f32
    l_ref[...] = alpha * l_ref[...] + jnp.sum(p, axis=-1, keepdims=True)
    acc_ref[...] = alpha * acc_ref[...] + jnp.einsum(
        "hqk,hkd->hqd", p.astype(jnp.bfloat16), vp_ref[...],
        preferred_element_type=jnp.float32)                     # (H, tq, vd)
    m_ref[...] = m_new
    # attention-dropout -> identity (eval mode)

    # ---- last kv step: normalize, fc projection, residual, LayerNorm
    @pl.when(ki == pl.num_programs(1) - 1)
    def _finalize():
        ctx = acc_ref[...] * pl.reciprocal(l_ref[...], approx=True)   # (H, tq, vd)
        fc_h = jnp.einsum("hqv,hvd->hqd", ctx.astype(jnp.bfloat16), wfc_ref[...],
                          preferred_element_type=jnp.float32)          # (H, tq, D)
        x = qres_ref[...] + bfc_ref[...] + jnp.sum(fc_h, axis=0)       # (tq, D)
        # fc-dropout -> identity (eval mode)
        mean = jnp.mean(x, axis=-1, keepdims=True)
        var = jnp.mean(jnp.square(x - mean), axis=-1, keepdims=True)
        y = (x - mean) * lax.rsqrt(var + eps)
        out_ref[...] = y * gamma_ref[...] + beta_ref[...]


def _round_up(x, m):
    return ((x + m - 1) // m) * m


def _device_kind():
    try:
        return jax.devices()[0].device_kind.lower()
    except Exception:
        return ""


def _pick_tiles(q_len, k_len):
    kind = _device_kind()
    is_v5e = ("v5 lite" in kind) or ("v5e" in kind) or ("v5litepod" in kind)
    is_v6 = "v6" in kind
    tq = 128 if q_len >= 128 else _round_up(q_len, 8)
    tk_pref = 128 if is_v5e else (512 if is_v6 else 256)
    tk = tk_pref if k_len >= tk_pref else _round_up(k_len, 8)
    return tq, tk


def _vmem_limit_bytes():
    kind = _device_kind()
    if "v6" in kind:
        return 96 * 1024 * 1024          # v6e: 128 MiB physical
    if ("v5 lite" in kind) or ("v5e" in kind) or ("v5litepod" in kind):
        return 32 * 1024 * 1024          # v5e: smaller scoped default, be conservative
    return 48 * 1024 * 1024              # v7x (64 MiB physical) & other: stay safe


def multi_head_attention(q, k, v, params, *, n_head, k_dim, v_dim, eps=1e-5):
    q_len, input_dim = q.shape
    k_len, _ = k.shape
    v_len, _ = v.shape
    assert k_len == v_len, "attention requires k_len == v_len"

    f32 = jnp.float32
    bf16 = jnp.bfloat16

    # ---- hoisted projections: single XLA matmuls (f32), scale folded into Q ----
    scale = 1.0 / float(k_dim) ** 0.5
    qp = (q @ params["w_q"].T) * scale                      # (q_len, H*kd)
    kp = k @ params["w_k"].T                                # (k_len, H*kd)
    vp = v @ params["w_v"].T                                # (k_len, H*vd)
    # head-major layout so per-head operands are whole trailing-dim slabs
    qp = qp.reshape(q_len, n_head, k_dim).transpose(1, 0, 2)   # (H, q_len, kd)
    kp = kp.reshape(k_len, n_head, k_dim).transpose(1, 0, 2)   # (H, k_len, kd)
    vp = vp.reshape(v_len, n_head, v_dim).transpose(1, 0, 2)   # (H, k_len, vd)

    tq, tk = _pick_tiles(q_len, k_len)
    q_pad = _round_up(q_len, tq)
    k_pad = _round_up(k_len, tk)

    def pad_axis(x, axis, new_size):
        if x.shape[axis] == new_size:
            return x
        cfg = [(0, 0)] * x.ndim
        cfg[axis] = (0, new_size - x.shape[axis])
        return jnp.pad(x, cfg)

    qp = pad_axis(qp, 1, q_pad).astype(bf16)
    kp = pad_axis(kp, 1, k_pad).astype(bf16)
    vp = pad_axis(vp, 1, k_pad).astype(bf16)
    qres = pad_axis(q.astype(f32), 0, q_pad)                # residual (f32)

    # fc weight packed head-major: (H, vd, D); bias / LN params as (1, D)
    wfc = params["w_fc"].T.reshape(n_head, v_dim, input_dim).astype(bf16)
    bfc = params["b_fc"].reshape(1, input_dim).astype(f32)
    gamma = params["ln_gamma"].reshape(1, input_dim).astype(f32)
    beta = params["ln_beta"].reshape(1, input_dim).astype(f32)

    n_q = q_pad // tq
    n_kv = k_pad // tk

    kernel = functools.partial(mha_flash_kernel, eps=eps, k_len=k_len, tk=tk,
                               kv_padded=(k_pad != k_len))

    grid_spec = pltpu.PrefetchScalarGridSpec(
        num_scalar_prefetch=0,
        grid=(n_q, n_kv),
        in_specs=[
            pl.BlockSpec((n_head, tq, k_dim), lambda qi, ki: (0, qi, 0)),   # q proj
            pl.BlockSpec((n_head, tk, k_dim), lambda qi, ki: (0, ki, 0)),   # k proj
            pl.BlockSpec((n_head, tk, v_dim), lambda qi, ki: (0, ki, 0)),   # v proj
            pl.BlockSpec((tq, input_dim), lambda qi, ki: (qi, 0)),          # residual
            pl.BlockSpec((n_head, v_dim, input_dim), lambda qi, ki: (0, 0, 0)),  # wfc
            pl.BlockSpec((1, input_dim), lambda qi, ki: (0, 0)),            # b_fc
            pl.BlockSpec((1, input_dim), lambda qi, ki: (0, 0)),            # gamma
            pl.BlockSpec((1, input_dim), lambda qi, ki: (0, 0)),            # beta
        ],
        out_specs=pl.BlockSpec((tq, input_dim), lambda qi, ki: (qi, 0)),
        scratch_shapes=[
            pltpu.VMEM((n_head, tq, 1), jnp.float32),       # running max m
            pltpu.VMEM((n_head, tq, 1), jnp.float32),       # running denom l
            pltpu.VMEM((n_head, tq, v_dim), jnp.float32),   # running context acc
        ],
    )

    out = pl.pallas_call(
        kernel,
        out_shape=jax.ShapeDtypeStruct((q_pad, input_dim), jnp.float32),
        grid_spec=grid_spec,
        compiler_params=pltpu.CompilerParams(
            dimension_semantics=("parallel", "arbitrary"),
            vmem_limit_bytes=_vmem_limit_bytes(),
        ),
    )(qp, kp, vp, qres, wfc, bfc, gamma, beta)

    return out[:q_len] if q_pad != q_len else out


def mha_reference(q, k, v, params, *, n_head, k_dim, v_dim, eps=1e-5):
    """Pure-JAX f32 reference of the PyTorch forward (eval mode, triplet=False)."""
    q_len, input_dim = q.shape
    qh = (q @ params["w_q"].T).reshape(q_len, n_head, k_dim).transpose(1, 0, 2)
    kh = (k @ params["w_k"].T).reshape(-1, n_head, k_dim).transpose(1, 0, 2)
    vh = (v @ params["w_v"].T).reshape(-1, n_head, v_dim).transpose(1, 0, 2)
    scores = jnp.einsum("hqd,hkd->hqk", qh, kh) / jnp.sqrt(jnp.float32(k_dim))
    attn = jax.nn.softmax(scores, axis=-1)
    ctx = jnp.einsum("hqk,hkd->hqd", attn, vh).transpose(1, 0, 2).reshape(q_len, -1)
    fc = ctx @ params["w_fc"].T + params["b_fc"]
    x = fc + q
    mean = jnp.mean(x, axis=-1, keepdims=True)
    var = jnp.mean(jnp.square(x - mean), axis=-1, keepdims=True)
    y = (x - mean) * lax.rsqrt(var + eps)
    return y * params["ln_gamma"] + params["ln_beta"]


def init_params(key, n_head, input_dim, k_dim, v_dim):
    ks = jax.random.split(key, 5)
    std_qk = jnp.sqrt(2.0 / (input_dim + k_dim))
    std_v = jnp.sqrt(2.0 / (input_dim + v_dim))
    std_fc = jnp.sqrt(2.0 / (input_dim + n_head * v_dim))
    bound_fc = 1.0 / jnp.sqrt(jnp.float32(n_head * v_dim))
    return {
        "w_q": std_qk * jax.random.normal(ks[0], (n_head * k_dim, input_dim), jnp.float32),
        "w_k": std_qk * jax.random.normal(ks[1], (n_head * k_dim, input_dim), jnp.float32),
        "w_v": std_v * jax.random.normal(ks[2], (n_head * v_dim, input_dim), jnp.float32),
        "w_fc": std_fc * jax.random.normal(ks[3], (input_dim, n_head * v_dim), jnp.float32),
        "b_fc": jax.random.uniform(ks[4], (input_dim,), jnp.float32,
                                   minval=-bound_fc, maxval=bound_fc),
        "ln_gamma": jnp.ones((input_dim,), jnp.float32),
        "ln_beta": jnp.zeros((input_dim,), jnp.float32),
    }


if __name__ == "__main__":
    n_head, input_dim, k_dim, v_dim = 2, 32, 16, 16
    seq = 8

    key = jax.random.PRNGKey(0)
    kq, kk, kv, kp = jax.random.split(key, 4)
    q = jax.random.normal(kq, (seq, input_dim), jnp.float32)
    k = jax.random.normal(kk, (seq, input_dim), jnp.float32)
    v = jax.random.normal(kv, (seq, input_dim), jnp.float32)
    params = init_params(kp, n_head, input_dim, k_dim, v_dim)

    out = multi_head_attention(q, k, v, params,
                               n_head=n_head, k_dim=k_dim, v_dim=v_dim)
    jax.block_until_ready(out)

    assert out.shape == (seq, input_dim)
    assert jnp.all(jnp.isfinite(out))

    # loose check vs f32 reference (kernel streams bf16 operands into the MXU)
    ref = mha_reference(q, k, v, params, n_head=n_head, k_dim=k_dim, v_dim=v_dim)
    max_err = float(jnp.max(jnp.abs(out - ref)))
    assert max_err < 0.25, f"max abs error {max_err}"

    print("KERNEL_OK")
</pallas_src>

<mosaic_0001>
module attributes {stable_mosaic.version = 11 : i64} {
  func.func @mha_flash_kernel(%arg0: i32, %arg1: i32, %arg2: memref<2x8x16xbf16, #tpu.memory_space<vmem>>, %arg3: memref<2x8x16xbf16, #tpu.memory_space<vmem>>, %arg4: memref<2x8x16xbf16, #tpu.memory_space<vmem>>, %arg5: memref<8x32xf32, #tpu.memory_space<vmem>>, %arg6: memref<2x16x32xbf16, #tpu.memory_space<vmem>>, %arg7: memref<1x32xf32, #tpu.memory_space<vmem>>, %arg8: memref<1x32xf32, #tpu.memory_space<vmem>>, %arg9: memref<1x32xf32, #tpu.memory_space<vmem>>, %arg10: memref<8x32xf32, #tpu.memory_space<vmem>>, %arg11: memref<2x8x1xf32, #tpu.memory_space<vmem>>, %arg12: memref<2x8x1xf32, #tpu.memory_space<vmem>>, %arg13: memref<2x8x16xf32, #tpu.memory_space<vmem>>) attributes {dimension_semantics = [#tpu.dimension_semantics<parallel>, #tpu.dimension_semantics<arbitrary>], iteration_bounds = array<i64: 1, 1>, scalar_prefetch = 0 : i64, scratch_operands = 3 : i64, tpu.core_type = #tpu.core_type<tc>, window_params = [{transform_indices = @transform_0, window_bounds = array<i64: 2, 8, 16>}, {transform_indices = @transform_1, window_bounds = array<i64: 2, 8, 16>}, {transform_indices = @transform_2, window_bounds = array<i64: 2, 8, 16>}, {transform_indices = @transform_3, window_bounds = array<i64: 8, 32>}, {pipeline_mode = #tpu.pipeline_mode<synchronous>, transform_indices = @transform_4, window_bounds = array<i64: 2, 16, 32>}, {pipeline_mode = #tpu.pipeline_mode<synchronous>, transform_indices = @transform_5, window_bounds = array<i64: 1, 32>}, {pipeline_mode = #tpu.pipeline_mode<synchronous>, transform_indices = @transform_6, window_bounds = array<i64: 1, 32>}, {pipeline_mode = #tpu.pipeline_mode<synchronous>, transform_indices = @transform_7, window_bounds = array<i64: 1, 32>}, {transform_indices = @transform_8, window_bounds = array<i64: 8, 32>}]} {
    %c0_i32 = arith.constant 0 : i32
    %0 = arith.cmpi eq, %arg1, %c0_i32 : i32
    %1 = arith.extui %0 : i1 to i32
    %c0_i32_0 = arith.constant 0 : i32
    %2 = arith.cmpi ne, %1, %c0_i32_0 : i32
    scf.if %2 {
      %cst_32 = arith.constant -1.000000e+30 : f32
      %33 = vector.broadcast %cst_32 : f32 to vector<2x8x1xf32>
      %c0_33 = arith.constant 0 : index
      %c0_34 = arith.constant 0 : index
      %c0_35 = arith.constant 0 : index
      %34 = vector.load %arg11[%c0_33, %c0_34, %c0_35] : memref<2x8x1xf32, #tpu.memory_space<vmem>>, vector<2x8x1xf32>
      tpu.vector_store %arg11[%c0_33, %c0_34, %c0_35], %33 {strides = array<i32>} : memref<2x8x1xf32, #tpu.memory_space<vmem>>, vector<2x8x1xf32>,
      %cst_36 = arith.constant 0.000000e+00 : f32
      %35 = vector.broadcast %cst_36 : f32 to vector<2x8x1xf32>
      %c0_37 = arith.constant 0 : index
      %c0_38 = arith.constant 0 : index
      %c0_39 = arith.constant 0 : index
      %36 = vector.load %arg12[%c0_37, %c0_38, %c0_39] : memref<2x8x1xf32, #tpu.memory_space<vmem>>, vector<2x8x1xf32>
      tpu.vector_store %arg12[%c0_37, %c0_38, %c0_39], %35 {strides = array<i32>} : memref<2x8x1xf32, #tpu.memory_space<vmem>>, vector<2x8x1xf32>,
      %cst_40 = arith.constant 0.000000e+00 : f32
      %37 = vector.broadcast %cst_40 : f32 to vector<2x8x16xf32>
      %c0_41 = arith.constant 0 : index
      %c0_42 = arith.constant 0 : index
      %c0_43 = arith.constant 0 : index
      %38 = vector.load %arg13[%c0_41, %c0_42, %c0_43] : memref<2x8x16xf32, #tpu.memory_space<vmem>>, vector<2x8x16xf32>
      tpu.vector_store %arg13[%c0_41, %c0_42, %c0_43], %37 {strides = array<i32>} : memref<2x8x16xf32, #tpu.memory_space<vmem>>, vector<2x8x16xf32>,
    } else {
    }
    %c0 = arith.constant 0 : index
    %c0_1 = arith.constant 0 : index
    %c0_2 = arith.constant 0 : index
    %3 = vector.load %arg2[%c0, %c0_1, %c0_2] : memref<2x8x16xbf16, #tpu.memory_space<vmem>>, vector<2x8x16xbf16>
    %c0_3 = arith.constant 0 : index
    %c0_4 = arith.constant 0 : index
    %c0_5 = arith.constant 0 : index
    %4 = vector.load %arg3[%c0_3, %c0_4, %c0_5] : memref<2x8x16xbf16, #tpu.memory_space<vmem>>, vector<2x8x16xbf16>
    "tpu.trace_start"() <{level = 10 : i32, message = "hqd,hkd->hqk"}> : () -> ()
    %cst = arith.constant dense<0.000000e+00> : vector<2x8x8xf32>
    %5 = tpu.matmul %3, %4, %cst {dimension_numbers = #tpu.dot_dimension_numbers<[2], [2], [1], [1], [0, 0, 0, 1, 1, 1], [0], [0]>} : vector<2x8x16xbf16>, vector<2x8x16xbf16>, vector<2x8x8xf32> -> vector<2x8x8xf32>
    "tpu.trace_stop"() : () -> ()
    %c0_6 = arith.constant 0 : index
    %c0_7 = arith.constant 0 : index
    %c0_8 = arith.constant 0 : index
    %6 = vector.load %arg11[%c0_6, %c0_7, %c0_8] : memref<2x8x1xf32, #tpu.memory_space<vmem>>, vector<2x8x1xf32>
    %cst_9 = arith.constant dense<0xFF800000> : vector<2x8xf32>
    %7 = vector.multi_reduction <maximumf>, %5, %cst_9 [2] : vector<2x8x8xf32> to vector<2x8xf32>
    %8 = vector.shape_cast %7 : vector<2x8xf32> to vector<2x8x1xf32>
    %9 = arith.maximumf %6, %8 : vector<2x8x1xf32>
    %10 = arith.subf %6, %9 : vector<2x8x1xf32>
    %11 = math.exp %10 : vector<2x8x1xf32>
    %12 = vector.broadcast %9 : vector<2x8x1xf32> to vector<2x8x8xf32>
    %13 = arith.subf %5, %12 : vector<2x8x8xf32>
    %14 = math.exp %13 : vector<2x8x8xf32>
    %c0_10 = arith.constant 0 : index
    %c0_11 = arith.constant 0 : index
    %c0_12 = arith.constant 0 : index
    %15 = vector.load %arg12[%c0_10, %c0_11, %c0_12] : memref<2x8x1xf32, #tpu.memory_space<vmem>>, vector<2x8x1xf32>
    %16 = arith.mulf %11, %15 : vector<2x8x1xf32>
    %cst_13 = arith.constant dense<0.000000e+00> : vector<2x8xf32>
    %17 = vector.multi_reduction <add>, %14, %cst_13 [2] : vector<2x8x8xf32> to vector<2x8xf32>
    %18 = vector.shape_cast %17 : vector<2x8xf32> to vector<2x8x1xf32>
    %19 = arith.addf %16, %18 : vector<2x8x1xf32>
    %c0_14 = arith.constant 0 : index
    %c0_15 = arith.constant 0 : index
    %c0_16 = arith.constant 0 : index
    %20 = vector.load %arg12[%c0_14, %c0_15, %c0_16] : memref<2x8x1xf32, #tpu.memory_space<vmem>>, vector<2x8x1xf32>
    tpu.vector_store %arg12[%c0_14, %c0_15, %c0_16], %19 {strides = array<i32>} : memref<2x8x1xf32, #tpu.memory_space<vmem>>, vector<2x8x1xf32>,
    %c0_17 = arith.constant 0 : index
    %c0_18 = arith.constant 0 : index
    %c0_19 = arith.constant 0 : index
    %21 = vector.load %arg13[%c0_17, %c0_18, %c0_19] : memref<2x8x16xf32, #tpu.memory_space<vmem>>, vector<2x8x16xf32>
    %22 = vector.broadcast %11 : vector<2x8x1xf32> to vector<2x8x16xf32>
    %23 = arith.mulf %22, %21 : vector<2x8x16xf32>
    %24 = arith.truncf %14 : vector<2x8x8xf32> to vector<2x8x8xbf16>
    %c0_20 = arith.constant 0 : index
    %c0_21 = arith.constant 0 : index
    %c0_22 = arith.constant 0 : index
    %25 = vector.load %arg4[%c0_20, %c0_21, %c0_22] : memref<2x8x16xbf16, #tpu.memory_space<vmem>>, vector<2x8x16xbf16>
    "tpu.trace_start"() <{level = 10 : i32, message = "hqk,hkd->hqd"}> : () -> ()
    %cst_23 = arith.constant dense<0.000000e+00> : vector<2x8x16xf32>
    %26 = tpu.matmul %24, %25, %cst_23 {dimension_numbers = #tpu.dot_dimension_numbers<[2], [1], [1], [2], [0, 0, 0, 1, 1, 2], [0], [0]>} : vector<2x8x8xbf16>, vector<2x8x16xbf16>, vector<2x8x16xf32> -> vector<2x8x16xf32>
    "tpu.trace_stop"() : () -> ()
    %27 = arith.addf %23, %26 : vector<2x8x16xf32>
    %c0_24 = arith.constant 0 : index
    %c0_25 = arith.constant 0 : index
    %c0_26 = arith.constant 0 : index
    %28 = vector.load %arg13[%c0_24, %c0_25, %c0_26] : memref<2x8x16xf32, #tpu.memory_space<vmem>>, vector<2x8x16xf32>
    tpu.vector_store %arg13[%c0_24, %c0_25, %c0_26], %27 {strides = array<i32>} : memref<2x8x16xf32, #tpu.memory_space<vmem>>, vector<2x8x16xf32>,
    %c0_27 = arith.constant 0 : index
    %c0_28 = arith.constant 0 : index
    %c0_29 = arith.constant 0 : index
    %29 = vector.load %arg11[%c0_27, %c0_28, %c0_29] : memref<2x8x1xf32, #tpu.memory_space<vmem>>, vector<2x8x1xf32>
    tpu.vector_store %arg11[%c0_27, %c0_28, %c0_29], %9 {strides = array<i32>} : memref<2x8x1xf32, #tpu.memory_space<vmem>>, vector<2x8x1xf32>,
    %c0_i32_30 = arith.constant 0 : i32
    %30 = arith.cmpi eq, %arg1, %c0_i32_30 : i32
    %31 = arith.extui %30 : i1 to i32
    %c0_i32_31 = arith.constant 0 : i32
    %32 = arith.cmpi ne, %31, %c0_i32_31 : i32
    scf.if %32 {
      %c0_32 = arith.constant 0 : index
      %c0_33 = arith.constant 0 : index
      %c0_34 = arith.constant 0 : index
      %33 = vector.load %arg13[%c0_32, %c0_33, %c0_34] : memref<2x8x16xf32, #tpu.memory_space<vmem>>, vector<2x8x16xf32>
      %c0_35 = arith.constant 0 : index
      %c0_36 = arith.constant 0 : index
      %c0_37 = arith.constant 0 : index
      %34 = vector.load %arg12[%c0_35, %c0_36, %c0_37] : memref<2x8x1xf32, #tpu.memory_space<vmem>>, vector<2x8x1xf32>
      %35 = tpu.reciprocal %34 {approx = true} : vector<2x8x1xf32> -> vector<2x8x1xf32>
      %36 = vector.broadcast %35 : vector<2x8x1xf32> to vector<2x8x16xf32>
      %37 = arith.mulf %33, %36 : vector<2x8x16xf32>
      %38 = arith.truncf %37 : vector<2x8x16xf32> to vector<2x8x16xbf16>
      %c0_38 = arith.constant 0 : index
      %c0_39 = arith.constant 0 : index
      %c0_40 = arith.constant 0 : index
      %39 = vector.load %arg6[%c0_38, %c0_39, %c0_40] : memref<2x16x32xbf16, #tpu.memory_space<vmem>>, vector<2x16x32xbf16>
      "tpu.trace_start"() <{level = 10 : i32, message = "hqv,hvd->hqd"}> : () -> ()
      %cst_41 = arith.constant dense<0.000000e+00> : vector<2x8x32xf32>
      %40 = tpu.matmul %38, %39, %cst_41 {dimension_numbers = #tpu.dot_dimension_numbers<[2], [1], [1], [2], [0, 0, 0, 1, 1, 2], [0], [0]>} : vector<2x8x16xbf16>, vector<2x16x32xbf16>, vector<2x8x32xf32> -> vector<2x8x32xf32>
      "tpu.trace_stop"() : () -> ()
      %c0_42 = arith.constant 0 : index
      %c0_43 = arith.constant 0 : index
      %41 = vector.load %arg5[%c0_42, %c0_43] : memref<8x32xf32, #tpu.memory_space<vmem>>, vector<8x32xf32>
      %c0_44 = arith.constant 0 : index
      %c0_45 = arith.constant 0 : index
      %42 = vector.load %arg7[%c0_44, %c0_45] : memref<1x32xf32, #tpu.memory_space<vmem>>, vector<1x32xf32>
      %43 = vector.broadcast %42 : vector<1x32xf32> to vector<8x32xf32>
      %44 = arith.addf %41, %43 : vector<8x32xf32>
      %cst_46 = arith.constant dense<0.000000e+00> : vector<8x32xf32>
      %45 = vector.multi_reduction <add>, %40, %cst_46 [0] : vector<2x8x32xf32> to vector<8x32xf32>
      %46 = arith.addf %44, %45 : vector<8x32xf32>
      %cst_47 = arith.constant dense<0.000000e+00> : vector<8xf32>
      %47 = vector.multi_reduction <add>, %46, %cst_47 [1] : vector<8x32xf32> to vector<8xf32>
      %48 = vector.shape_cast %47 : vector<8xf32> to vector<8x1xf32>
      %cst_48 = arith.constant 3.200000e+01 : f32
      %49 = vector.broadcast %cst_48 : f32 to vector<8x1xf32>
      %50 = arith.divf %48, %49 : vector<8x1xf32>
      %51 = vector.broadcast %50 : vector<8x1xf32> to vector<8x32xf32>
      %52 = arith.subf %46, %51 : vector<8x32xf32>
      %53 = arith.mulf %52, %52 : vector<8x32xf32>
      %cst_49 = arith.constant dense<0.000000e+00> : vector<8xf32>
      %54 = vector.multi_reduction <add>, %53, %cst_49 [1] : vector<8x32xf32> to vector<8xf32>
      %55 = vector.shape_cast %54 : vector<8xf32> to vector<8x1xf32>
      %cst_50 = arith.constant 3.200000e+01 : f32
      %56 = vector.broadcast %cst_50 : f32 to vector<8x1xf32>
      %57 = arith.divf %55, %56 : vector<8x1xf32>
      %58 = vector.broadcast %50 : vector<8x1xf32> to vector<8x32xf32>
      %59 = arith.subf %46, %58 : vector<8x32xf32>
      %cst_51 = arith.constant 9.99999974E-6 : f32
      %60 = vector.broadcast %cst_51 : f32 to vector<8x1xf32>
      %61 = arith.addf %57, %60 : vector<8x1xf32>
      %62 = math.rsqrt %61 : vector<8x1xf32>
      %63 = vector.broadcast %62 : vector<8x1xf32> to vector<8x32xf32>
      %64 = arith.mulf %59, %63 : vector<8x32xf32>
      %c0_52 = arith.constant 0 : index
      %c0_53 = arith.constant 0 : index
      %65 = vector.load %arg8[%c0_52, %c0_53] : memref<1x32xf32, #tpu.memory_space<vmem>>, vector<1x32xf32>
      %66 = vector.broadcast %65 : vector<1x32xf32> to vector<8x32xf32>
      %67 = arith.mulf %64, %66 : vector<8x32xf32>
      %c0_54 = arith.constant 0 : index
      %c0_55 = arith.constant 0 : index
      %68 = vector.load %arg9[%c0_54, %c0_55] : memref<1x32xf32, #tpu.memory_space<vmem>>, vector<1x32xf32>
      %69 = vector.broadcast %68 : vector<1x32xf32> to vector<8x32xf32>
      %70 = arith.addf %67, %69 : vector<8x32xf32>
      %c0_56 = arith.constant 0 : index
      %c0_57 = arith.constant 0 : index
      %71 = vector.load %arg10[%c0_56, %c0_57] : memref<8x32xf32, #tpu.memory_space<vmem>>, vector<8x32xf32>
      tpu.vector_store %arg10[%c0_56, %c0_57], %70 {strides = array<i32>} : memref<8x32xf32, #tpu.memory_space<vmem>>, vector<8x32xf32>,
    } else {
    }
    return
  }
  func.func @transform_0(%arg0: i32, %arg1: i32) -> (i32, i32, i32) {
    %c0_i32 = arith.constant 0 : i32
    %c0_i32_0 = arith.constant 0 : i32
    %c0_i32_1 = arith.constant 0 : i32
    return %c0_i32, %arg0, %c0_i32_0 : i32, i32, i32
  }
  func.func @transform_1(%arg0: i32, %arg1: i32) -> (i32, i32, i32) {
    %c0_i32 = arith.constant 0 : i32
    %c0_i32_0 = arith.constant 0 : i32
    %c0_i32_1 = arith.constant 0 : i32
    return %c0_i32, %arg1, %c0_i32_0 : i32, i32, i32
  }
  func.func @transform_2(%arg0: i32, %arg1: i32) -> (i32, i32, i32) {
    %c0_i32 = arith.constant 0 : i32
    %c0_i32_0 = arith.constant 0 : i32
    %c0_i32_1 = arith.constant 0 : i32
    return %c0_i32, %arg1, %c0_i32_0 : i32, i32, i32
  }
  func.func @transform_3(%arg0: i32, %arg1: i32) -> (i32, i32) {
    %c0_i32 = arith.constant 0 : i32
    %c0_i32_0 = arith.constant 0 : i32
    return %arg0, %c0_i32 : i32, i32
  }
  func.func @transform_4(%arg0: i32, %arg1: i32) -> (i32, i32, i32) {
    %c0_i32 = arith.constant 0 : i32
    %c0_i32_0 = arith.constant 0 : i32
    %c0_i32_1 = arith.constant 0 : i32
    %c0_i32_2 = arith.constant 0 : i32
    return %c0_i32, %c0_i32_0, %c0_i32_1 : i32, i32, i32
  }
  func.func @transform_5(%arg0: i32, %arg1: i32) -> (i32, i32) {
    %c0_i32 = arith.constant 0 : i32
    %c0_i32_0 = arith.constant 0 : i32
    %c0_i32_1 = arith.constant 0 : i32
    return %c0_i32, %c0_i32_0 : i32, i32
  }
  func.func @transform_6(%arg0: i32, %arg1: i32) -> (i32, i32) {
    %c0_i32 = arith.constant 0 : i32
    %c0_i32_0 = arith.constant 0 : i32
    %c0_i32_1 = arith.constant 0 : i32
    return %c0_i32, %c0_i32_0 : i32, i32
  }
  func.func @transform_7(%arg0: i32, %arg1: i32) -> (i32, i32) {
    %c0_i32 = arith.constant 0 : i32
    %c0_i32_0 = arith.constant 0 : i32
    %c0_i32_1 = arith.constant 0 : i32
    return %c0_i32, %c0_i32_0 : i32, i32
  }
  func.func @transform_8(%arg0: i32, %arg1: i32) -> (i32, i32) {
    %c0_i32 = arith.constant 0 : i32
    %c0_i32_0 = arith.constant 0 : i32
    return %arg0, %c0_i32 : i32, i32
  }
}

</mosaic_0001>

<llo_original>
// kernel: tpu_custom_call.1
$region0: #{tpu_custom_call.1}
  #allocation0 [shape = 'u32[]', space=smem, size = 0x4, offset = 0x4, fixed_abs, tag = 'smem constant byte address 0x4 - core index']
  #allocation1 [shape = 'u32[144,128]{1,0:T(1,128)}', space=vmem, size = 0x12000, scoped, tag = 'internal scratch']
  #allocation2 [shape = 'f32[2,8,1]{2,1,0:T(8,128)}', space=vmem, size = 0x2000, scoped, tag = 'scratch operand']
  #allocation3 [shape = 'f32[2,8,1]{2,1,0:T(8,128)}', space=vmem, size = 0x2000, scoped, tag = 'scratch operand']
  #allocation4 [shape = 'f32[2,8,16]{2,1,0:T(8,128)}', space=vmem, size = 0x2000, scoped, tag = 'scratch operand']
  %s0 = inlined_call_operand.hbm [shape: bf16[2,8,16], index: 0, kind: input, shape index: {}]
  %s1 = inlined_call_operand.hbm [shape: bf16[2,8,16], index: 1, kind: input, shape index: {}]
  %s2 = inlined_call_operand.hbm [shape: bf16[2,8,16], index: 2, kind: input, shape index: {}]
  %s3 = inlined_call_operand.hbm [shape: f32[8,32], index: 3, kind: input, shape index: {}]
  %s4 = inlined_call_operand.hbm [shape: bf16[2,16,32], index: 4, kind: input, shape index: {}]
  %s5 = inlined_call_operand.vmem [shape: f32[1,32], index: 5, kind: input, shape index: {}]
  %s6 = inlined_call_operand.vmem [shape: f32[1,32], index: 6, kind: input, shape index: {}]
  %s7 = inlined_call_operand.vmem [shape: f32[1,32], index: 7, kind: input, shape index: {}]
  %s8 = inlined_call_operand.hbm [shape: f32[8,32], index: 8, kind: output, shape index: {}]
  %s9 = sld [smem:[#allocation0]]
  $region70: #{tpu_custom_call.1} parent=0
    _
  %s11 = ssub.s32 1, %s9
  %s12 = scalar_select 0, %s11, %s9
  $region1: #{tpu_custom_call.1} parent=0
    #allocation5 [shape = 'u8[4096]{0}', space=vmem, size = 0x1000, scoped, tag = 'input window, operand 0, single buffered']
    #allocation6 [shape = 's32[1]{0}', space=sflag, size = 0x4, scoped, tag = 'scoped memory for tpu_custom_call.1']
    #allocation7 [shape = 's32[1]{0}', space=sflag, size = 0x4, scoped, tag = 'scoped memory for tpu_custom_call.1']
    #allocation8 [shape = 'u8[4096]{0}', space=vmem, size = 0x1000, scoped, tag = 'input window, operand 1, single buffered']
    #allocation9 [shape = 's32[1]{0}', space=sflag, size = 0x4, scoped, tag = 'scoped memory for tpu_custom_call.1']
    #allocation10 [shape = 'u8[4096]{0}', space=vmem, size = 0x1000, scoped, tag = 'input window, operand 2, single buffered']
    #allocation11 [shape = 'u8[4096]{0}', space=vmem, size = 0x1000, scoped, tag = 'input window, operand 3, single buffered']
    #allocation12 [shape = 's32[1]{0}', space=sflag, size = 0x4, scoped, tag = 'scoped memory for tpu_custom_call.1']
    #allocation13 [shape = 'u8[8192]{0}', space=vmem, size = 0x2000, scoped, tag = 'input window, operand 4, single buffered']
    #allocation14 [shape = 'u8[4096]{0}', space=vmem, size = 0x1000, scoped, tag = 'output window, operand 0, single buffered']
    %13 = vsyncpa [#allocation6], 0
    %14 = vsyncpa [#allocation9], 0
    %15 = vsyncpa [#allocation12], 0
    %16 = vsyncpa [#allocation7], 0
    // Predicated region
    $region2: #{tpu_custom_call.1} parent=1 // pred_check
      _
    $region3: #{tpu_custom_call.1} parent=1 // pred_check_branch
      %18 = sbr.rel (0) target = $region5
    $region4: #{tpu_custom_call.1} parent=1 // pred_region
      %s20 = ssub.s32 128, 128
      %21 = vsyncadd [#allocation6], %s20
      %s22 = sshll.u32 [#allocation5], 4
      %s23 = int_to_ptr.vmem [resolvable:$true] %s22
      %28 = dma.hbm_to_vmem [thread:$0]  %s0, 128, %s23, [#allocation6], 64, 64, 4
    $region5: #{tpu_custom_call.1} parent=1 // pred_fallthru
      _
    // Predicated region
    $region6: #{tpu_custom_call.1} parent=1 // pred_check
      _
    $region7: #{tpu_custom_call.1} parent=1 // pred_check_branch
      %30 = sbr.rel (0) target = $region9
    $region8: #{tpu_custom_call.1} parent=1 // pred_region
      %s32 = ssub.s32 128, 128
      %33 = vsyncadd [#allocation9], %s32
      %s34 = sshll.u32 [#allocation8], 4
      %s35 = int_to_ptr.vmem [resolvable:$true] %s34
      %40 = dma.hbm_to_vmem [thread:$0]  %s1, 128, %s35, [#allocation9], 64, 64, 4
    $region9: #{tpu_custom_call.1} parent=1 // pred_fallthru
      _
    // Predicated region
    $region10: #{tpu_custom_call.1} parent=1 // pred_check
      _
    $region11: #{tpu_custom_call.1} parent=1 // pred_check_branch
      %42 = sbr.rel (0) target = $region13
    $region12: #{tpu_custom_call.1} parent=1 // pred_region
      %s44 = ssub.s32 128, 128
      %45 = vsyncadd [#allocation9], %s44
      %s46 = sshll.u32 [#allocation10], 4
      %s47 = int_to_ptr.vmem [resolvable:$true] %s46
      %52 = dma.hbm_to_vmem [thread:$0]  %s2, 128, %s47, [#allocation9], 64, 64, 4
    $region13: #{tpu_custom_call.1} parent=1 // pred_fallthru
      _
    // Predicated region
    $region14: #{tpu_custom_call.1} parent=1 // pred_check
      _
    $region15: #{tpu_custom_call.1} parent=1 // pred_check_branch
      %54 = sbr.rel (0) target = $region17
    $region16: #{tpu_custom_call.1} parent=1 // pred_region
      %s56 = ssub.s32 128, 128
      %57 = vsyncadd [#allocation12], %s56
      %s59 = sshll.u32 [#allocation11], 4
      %s60 = int_to_ptr.vmem [resolvable:$true] %s59
      %62 = dma.hbm_to_vmem [thread:$0]  %s3, 128, %s60, [#allocation12]
    $region17: #{tpu_custom_call.1} parent=1 // pred_fallthru
      _
    // Predicated region
    $region18: #{tpu_custom_call.1} parent=1 // pred_check
      _
    $region19: #{tpu_custom_call.1} parent=1 // pred_check_branch
      %64 = sbr.rel (0) target = $region21
    $region20: #{tpu_custom_call.1} parent=1 // pred_region
      %s66 = ssub.s32 256, 256
      %67 = vsyncadd [#allocation12], %s66
      %s68 = sshll.u32 [#allocation13], 4
      %s69 = int_to_ptr.vmem [resolvable:$true] %s68
      %74 = dma.hbm_to_vmem [thread:$0]  %s4, 256, %s69, [#allocation12], 64, 64, 4
    $region21: #{tpu_custom_call.1} parent=1 // pred_fallthru
      _
    // Predicated region
    $region22: #{tpu_custom_call.1} parent=1 // pred_check
      _
    $region23: #{tpu_custom_call.1} parent=1 // pred_check_branch
      %76 = sbr.rel (0) target = $region25
    $region24: #{tpu_custom_call.1} parent=1 // pred_region
      _
    $region25: #{tpu_custom_call.1} parent=1 // pred_fallthru
      _
    // Predicated region
    $region26: #{tpu_custom_call.1} parent=1 // pred_check
      _
    $region27: #{tpu_custom_call.1} parent=1 // pred_check_branch
      %78 = sbr.rel (0) target = $region29
    $region28: #{tpu_custom_call.1} parent=1 // pred_region
      _
    $region29: #{tpu_custom_call.1} parent=1 // pred_fallthru
      _
    // Predicated region
    $region30: #{tpu_custom_call.1} parent=1 // pred_check
      _
    $region31: #{tpu_custom_call.1} parent=1 // pred_check_branch
      %80 = sbr.rel (0) target = $region33
    $region32: #{tpu_custom_call.1} parent=1 // pred_region
      _
    $region33: #{tpu_custom_call.1} parent=1 // pred_fallthru
      _
    // Predicated region
    $region34: #{tpu_custom_call.1} parent=1 // pred_check
      _
    $region35: #{tpu_custom_call.1} parent=1 // pred_check_branch
      %82 = sbr.rel (0) target = $region37
    $region36: #{tpu_custom_call.1} parent=1 // pred_region
      %83 = dma.done [#allocation6], 128
    $region37: #{tpu_custom_call.1} parent=1 // pred_fallthru
      _
    // Predicated region
    $region38: #{tpu_custom_call.1} parent=1 // pred_check
      _
    $region39: #{tpu_custom_call.1} parent=1 // pred_check_branch
      %85 = sbr.rel (0) target = $region41
    $region40: #{tpu_custom_call.1} parent=1 // pred_region
      %86 = dma.done [#allocation9], 128
    $region41: #{tpu_custom_call.1} parent=1 // pred_fallthru
      _
    // Predicated region
    $region42: #{tpu_custom_call.1} parent=1 // pred_check
      _
    $region43: #{tpu_custom_call.1} parent=1 // pred_check_branch
      %88 = sbr.rel (0) target = $region45
    $region44: #{tpu_custom_call.1} parent=1 // pred_region
      %89 = dma.done [#allocation9], 128
    $region45: #{tpu_custom_call.1} parent=1 // pred_fallthru
      _
    // Predicated region
    $region46: #{tpu_custom_call.1} parent=1 // pred_check
      _
    $region47: #{tpu_custom_call.1} parent=1 // pred_check_branch
      %91 = sbr.rel (0) target = $region49
    $region48: #{tpu_custom_call.1} parent=1 // pred_region
      %92 = dma.done [#allocation12], 128
    $region49: #{tpu_custom_call.1} parent=1 // pred_fallthru
      _
    // Predicated region
    $region50: #{tpu_custom_call.1} parent=1 // pred_check
      _
    $region51: #{tpu_custom_call.1} parent=1 // pred_check_branch
      %94 = sbr.rel (0) target = $region53
    $region52: #{tpu_custom_call.1} parent=1 // pred_region
      %95 = dma.done [#allocation12], 256
    $region53: #{tpu_custom_call.1} parent=1 // pred_fallthru
      _
    %p97 = scmp.eq.s32.totalorder 0, 0
    // Predicated region
    $region54: #{tpu_custom_call.1} parent=1 // pred_check
      %p98 = pneg %p97
    $region55: #{tpu_custom_call.1} parent=1 // pred_check_branch
      %100 = sbr.rel (%p98) target = $region57
    $region56: #{tpu_custom_call.1} parent=1 // pred_region
      %vm101 = vcmask 7168
      %102 = vst.msk [vmem:[#allocation2] sm:$0xff] %vm101, -1e+30
      %103 = vst.msk [vmem:[#allocation2 + $0x8] sm:$0xff] %vm101, -1e+30
      %104 = vst.msk [vmem:[#allocation3] sm:$0xff] %vm101, 0.0
      %105 = vst.msk [vmem:[#allocation3 + $0x8] sm:$0xff] %vm101, 0.0
      %vm106 = vcmask 130048
      %107 = vst.msk [vmem:[#allocation4] sm:$0xff] %vm106, 0.0
      %108 = vst.msk [vmem:[#allocation4 + $0x8] sm:$0xff] %vm106, 0.0
    $region57: #{tpu_custom_call.1} parent=1 // pred_fallthru
      _
    %v109 = vld [vmem:[#allocation5] sm:$0xf]
    %v110 = vld [vmem:[#allocation5 + $0x4] sm:$0xf]
    %v111 = vld [vmem:[#allocation8] sm:$0xf]
    %v112 = vld [vmem:[#allocation8 + $0x4] sm:$0xf]
    %vm113 = vcmask 130048
    %v115 = vsel %vm113, %v109, 0
    %v118 = vsel %vm113, %v111, 0
    %120 = vmatprep.subr.bf16.mxu0 0
    %121 = vmatpush1.bf16.xpose.msra.mxu0 0
    %122 = vmatprep.subr.bf16.mxu0 0
    %123 = vmatpush1.bf16.xpose.msra.mxu0 0
    %124 = vmatprep.subr.bf16.mxu0 0
    %125 = vmatpush1.bf16.xpose.msra.mxu0 0
    %126 = vmatprep.subr.bf16.mxu0 0
    %127 = vmatpush1.bf16.xpose.msra.mxu0 0
    %128 = vmatprep.subr.bf16.mxu0 0
    %129 = vmatpush1.bf16.xpose.msra.mxu0 0
    %130 = vmatprep.subr.bf16.mxu0 0
    %131 = vmatpush1.bf16.xpose.msra.mxu0 0
    %132 = vmatprep.subr.bf16.mxu0 0
    %133 = vmatpush1.bf16.xpose.msra.mxu0 0
    %134 = vmatprep.subr.bf16.mxu0 0
    %135 = vmatpush1.bf16.xpose.msra.mxu0 %v118
    %136 = vmatprep.subr.bf16.mxu0 0
    %137 = vmatpush2.bf16.xpose.msra.mxu0 0
    %138 = vmatprep.subr.bf16.mxu0 0
    %139 = vmatpush2.bf16.xpose.msra.mxu0 0
    %140 = vmatprep.subr.bf16.mxu0 0
    %141 = vmatpush2.bf16.xpose.msra.mxu0 0
    %142 = vmatprep.subr.bf16.mxu0 0
    %143 = vmatpush2.bf16.xpose.msra.mxu0 0
    %144 = vmatprep.subr.bf16.mxu0 0
    %145 = vmatpush2.bf16.xpose.msra.mxu0 0
    %146 = vmatprep.subr.bf16.mxu0 0
    %147 = vmatpush2.bf16.xpose.msra.mxu0 0
    %148 = vmatprep.subr.bf16.mxu0 0
    %149 = vmatpush2.bf16.xpose.msra.mxu0 0
    %150 = vmatprep.subr.bf16.mxu0 0
    %151 = vmatpush2.bf16.xpose.msra.mxu0 0
    %152 = vmatprep.mubr.bf16.mxu0 0
    %153 = vmatmul.mubr.bf16.gmra.mxu0 %v115
    %v154 = vpop.f32.mrf.mxu0
    %v155 = vadd.f32 0.0, %v154
    %v156 = vpop.f32.mrf.mxu0
    %v157 = vpop.f32.mrf.mxu0
    %v158 = vpop.f32.mrf.mxu0
    %159 = vdwg.mxu0
    %v161 = vsel %vm113, %v110, 0
    %v164 = vsel %vm113, %v112, 0
    %166 = vmatprep.subr.bf16.mxu0 0
    %167 = vmatpush1.bf16.xpose.msra.mxu0 0
    %168 = vmatprep.subr.bf16.mxu0 0
    %169 = vmatpush1.bf16.xpose.msra.mxu0 0
    %170 = vmatprep.subr.bf16.mxu0 0
    %171 = vmatpush1.bf16.xpose.msra.mxu0 0
    %172 = vmatprep.subr.bf16.mxu0 0
    %173 = vmatpush1.bf16.xpose.msra.mxu0 0
    %174 = vmatprep.subr.bf16.mxu0 0
    %175 = vmatpush1.bf16.xpose.msra.mxu0 0
    %176 = vmatprep.subr.bf16.mxu0 0
    %177 = vmatpush1.bf16.xpose.msra.mxu0 0
    %178 = vmatprep.subr.bf16.mxu0 0
    %179 = vmatpush1.bf16.xpose.msra.mxu0 0
    %180 = vmatprep.subr.bf16.mxu0 0
    %181 = vmatpush1.bf16.xpose.msra.mxu0 %v164
    %182 = vmatprep.subr.bf16.mxu0 0
    %183 = vmatpush2.bf16.xpose.msra.mxu0 0
    %184 = vmatprep.subr.bf16.mxu0 0
    %185 = vmatpush2.bf16.xpose.msra.mxu0 0
    %186 = vmatprep.subr.bf16.mxu0 0
    %187 = vmatpush2.bf16.xpose.msra.mxu0 0
    %188 = vmatprep.subr.bf16.mxu0 0
    %189 = vmatpush2.bf16.xpose.msra.mxu0 0
    %190 = vmatprep.subr.bf16.mxu0 0
    %191 = vmatpush2.bf16.xpose.msra.mxu0 0
    %192 = vmatprep.subr.bf16.mxu0 0
    %193 = vmatpush2.bf16.xpose.msra.mxu0 0
    %194 = vmatprep.subr.bf16.mxu0 0
    %195 = vmatpush2.bf16.xpose.msra.mxu0 0
    %196 = vmatprep.subr.bf16.mxu0 0
    %197 = vmatpush2.bf16.xpose.msra.mxu0 0
    %198 = vmatprep.mubr.bf16.mxu0 0
    %199 = vmatmul.mubr.bf16.gmra.mxu0 %v161
    %v200 = vpop.f32.mrf.mxu0
    %v201 = vadd.f32 0.0, %v200
    %v202 = vpop.f32.mrf.mxu0
    %v203 = vpop.f32.mrf.mxu0
    %v204 = vpop.f32.mrf.mxu0
    %205 = vdwg.mxu0
    %v206 = vld [vmem:[#allocation2] sm:$0xff]
    %v207 = vld [vmem:[#allocation2 + $0x8] sm:$0xff]
    %vm208 = vcmask 64512
    %v209 = vsel %vm208, %v155, -inf
    %210 = vmax.xlane.f32.xlu0 %v209
    %v211 = vpop.xlane.xlu0 %210
    %v212 = vsel %vm208, %v201, -inf
    %213 = vmax.xlane.f32.xlu0 %v212
    %v214 = vpop.xlane.xlu0 %213
    %v215 = vmax.f32 %v206, %v211
    %v216 = vmax.f32 %v207, %v214
    %v217 = vsub.f32 %v206, %v215
    %v218 = vsub.f32 %v207, %v216
    %v219 = vmul.f32 %v217, 1.442695
    %v220 = vpow.pop %v219
    %v221 = vmul.f32 %v218, 1.442695
    %v222 = vpow.pop %v221
    %224 = vset.pattern.permute.xlu0 0
    %225 = vperm.xlu0 %224, %v215
    %v226 = vpop.permute.xlu0 %225
    %229 = vset.pattern.permute.xlu0 0
    %230 = vperm.xlu0 %229, %v216
    %v231 = vpop.permute.xlu0 %230
    %v233 = vsub.f32 %v155, %v226
    %v234 = vsub.f32 %v201, %v231
    %v235 = vmul.f32 %v233, 1.442695
    %v236 = vpow.pop %v235
    %v237 = vmul.f32 %v234, 1.442695
    %v238 = vpow.pop %v237
    %v239 = vld [vmem:[#allocation3] sm:$0xff]
    %v240 = vld [vmem:[#allocation3 + $0x8] sm:$0xff]
    %v241 = vmul.f32 %v220, %v239
    %v242 = vmul.f32 %v222, %v240
    %v243 = vsel %vm208, %v236, 0.0
    %244 = vadd.xlane.f32.xlu0 %v243
    %v245 = vpop.xlane.xlu0 %244
    %v246 = vsel %vm208, %v238, 0.0
    %247 = vadd.xlane.f32.xlu0 %v246
    %v248 = vpop.xlane.xlu0 %247
    %v249 = vadd.f32 %v241, %v245
    %v250 = vadd.f32 %v242, %v248
    %vm251 = vcmask 7168
    %252 = vst.msk [vmem:[#allocation3] sm:$0xff] %vm251, %v249
    %253 = vst.msk [vmem:[#allocation3 + $0x8] sm:$0xff] %vm251, %v250
    %v254 = vld [vmem:[#allocation4] sm:$0xff]
    %v255 = vld [vmem:[#allocation4 + $0x8] sm:$0xff]
    %257 = vset.pattern.permute.xlu0 0
    %258 = vperm.xlu0 %257, %v220
    %v259 = vpop.permute.xlu0 %258
    %262 = vset.pattern.permute.xlu0 0
    %263 = vperm.xlu0 %262, %v222
    %v264 = vpop.permute.xlu0 %263
    %v266 = vmul.f32 %v259, %v254
    %v267 = vmul.f32 %v264, %v255
    %v268 = vpack.c.bf16 %v236, %v236
    %v269 = vpack.c.bf16 %v238, %v238
    %v270 = vld [vmem:[#allocation10] sm:$0xf]
    %v271 = vld [vmem:[#allocation10 + $0x4] sm:$0xf]
    %v273 = vsel %vm208, %v268, 0
    %vm275 = vcmask 1043456
    %v277 = vsel %vm275, %v270, 0
    %279 = vmatprep.subr.bf16.mxu0 0
    %280 = vmatpush1.bf16.msra.mxu0 0
    %281 = vmatprep.subr.bf16.mxu0 0
    %282 = vmatpush1.bf16.msra.mxu0 0
    %283 = vmatprep.subr.bf16.mxu0 0
    %284 = vmatpush1.bf16.msra.mxu0 0
    %285 = vmatprep.subr.bf16.mxu0 0
    %286 = vmatpush1.bf16.msra.mxu0 0
    %287 = vmatprep.subr.bf16.mxu0 0
    %288 = vmatpush1.bf16.msra.mxu0 0
    %289 = vmatprep.subr.bf16.mxu0 0
    %290 = vmatpush1.bf16.msra.mxu0 0
    %291 = vmatprep.subr.bf16.mxu0 0
    %292 = vmatpush1.bf16.msra.mxu0 0
    %293 = vmatprep.subr.bf16.mxu0 0
    %294 = vmatpush1.bf16.msra.mxu0 %v277
    %295 = vmatprep.subr.bf16.mxu0 0
    %296 = vmatpush2.bf16.msra.mxu0 0
    %297 = vmatprep.subr.bf16.mxu0 0
    %298 = vmatpush2.bf16.msra.mxu0 0
    %299 = vmatprep.subr.bf16.mxu0 0
    %300 = vmatpush2.bf16.msra.mxu0 0
    %301 = vmatprep.subr.bf16.mxu0 0
    %302 = vmatpush2.bf16.msra.mxu0 0
    %303 = vmatprep.subr.bf16.mxu0 0
    %304 = vmatpush2.bf16.msra.mxu0 0
    %305 = vmatprep.subr.bf16.mxu0 0
    %306 = vmatpush2.bf16.msra.mxu0 0
    %307 = vmatprep.subr.bf16.mxu0 0
    %308 = vmatpush2.bf16.msra.mxu0 0
    %309 = vmatprep.subr.bf16.mxu0 0
    %310 = vmatpush2.bf16.msra.mxu0 0
    %311 = vmatprep.mubr.bf16.mxu0 0
    %312 = vmatmul.mubr.bf16.gmra.mxu0 %v273
    %v313 = vpop.f32.mrf.mxu0
    %v314 = vadd.f32 0.0, %v313
    %v315 = vpop.f32.mrf.mxu0
    %v316 = vpop.f32.mrf.mxu0
    %v317 = vpop.f32.mrf.mxu0
    %318 = vdwg.mxu0
    %v320 = vsel %vm208, %v269, 0
    %v323 = vsel %vm275, %v271, 0
    %325 = vmatprep.subr.bf16.mxu0 0
    %326 = vmatpush1.bf16.msra.mxu0 0
    %327 = vmatprep.subr.bf16.mxu0 0
    %328 = vmatpush1.bf16.msra.mxu0 0
    %329 = vmatprep.subr.bf16.mxu0 0
    %330 = vmatpush1.bf16.msra.mxu0 0
    %331 = vmatprep.subr.bf16.mxu0 0
    %332 = vmatpush1.bf16.msra.mxu0 0
    %333 = vmatprep.subr.bf16.mxu0 0
    %334 = vmatpush1.bf16.msra.mxu0 0
    %335 = vmatprep.subr.bf16.mxu0 0
    %336 = vmatpush1.bf16.msra.mxu0 0
    %337 = vmatprep.subr.bf16.mxu0 0
    %338 = vmatpush1.bf16.msra.mxu0 0
    %339 = vmatprep.subr.bf16.mxu0 0
    %340 = vmatpush1.bf16.msra.mxu0 %v323
    %341 = vmatprep.subr.bf16.mxu0 0
    %342 = vmatpush2.bf16.msra.mxu0 0
    %343 = vmatprep.subr.bf16.mxu0 0
    %344 = vmatpush2.bf16.msra.mxu0 0
    %345 = vmatprep.subr.bf16.mxu0 0
    %346 = vmatpush2.bf16.msra.mxu0 0
    %347 = vmatprep.subr.bf16.mxu0 0
    %348 = vmatpush2.bf16.msra.mxu0 0
    %349 = vmatprep.subr.bf16.mxu0 0
    %350 = vmatpush2.bf16.msra.mxu0 0
    %351 = vmatprep.subr.bf16.mxu0 0
    %352 = vmatpush2.bf16.msra.mxu0 0
    %353 = vmatprep.subr.bf16.mxu0 0
    %354 = vmatpush2.bf16.msra.mxu0 0
    %355 = vmatprep.subr.bf16.mxu0 0
    %356 = vmatpush2.bf16.msra.mxu0 0
    %357 = vmatprep.mubr.bf16.mxu0 0
    %358 = vmatmul.mubr.bf16.gmra.mxu0 %v320
    %v359 = vpop.f32.mrf.mxu0
    %v360 = vadd.f32 0.0, %v359
    %v361 = vpop.f32.mrf.mxu0
    %v362 = vpop.f32.mrf.mxu0
    %v363 = vpop.f32.mrf.mxu0
    %364 = vdwg.mxu0
    %v365 = vadd.f32 %v266, %v314
    %v366 = vadd.f32 %v267, %v360
    %367 = vst.msk [vmem:[#allocation4] sm:$0xff] %vm113, %v365
    %368 = vst.msk [vmem:[#allocation4 + $0x8] sm:$0xff] %vm113, %v366
    %369 = vst.msk [vmem:[#allocation2] sm:$0xff] %vm251, %v215
    %370 = vst.msk [vmem:[#allocation2 + $0x8] sm:$0xff] %vm251, %v216
    // Predicated region
    $region58: #{tpu_custom_call.1} parent=1 // pred_check
      %p371 = pneg %p97
    $region59: #{tpu_custom_call.1} parent=1 // pred_check_branch
      %373 = sbr.rel (%p371) target = $region61
    $region60: #{tpu_custom_call.1} parent=1 // pred_region
      %v374 = vld [vmem:[#allocation4] sm:$0xff]
      %v375 = vld [vmem:[#allocation4 + $0x8] sm:$0xff]
      %v376 = vld [vmem:[#allocation3] sm:$0xff]
      %v377 = vld [vmem:[#allocation3 + $0x8] sm:$0xff]
      %v378 = vrcp.pop %v376
      %v379 = vrcp.pop %v377
      %381 = vset.pattern.permute.xlu0 0
      %382 = vperm.xlu0 %381, %v378
      %v383 = vpop.permute.xlu0 %382
      %386 = vset.pattern.permute.xlu0 0
      %387 = vperm.xlu0 %386, %v379
      %v388 = vpop.permute.xlu0 %387
      %v390 = vmul.f32 %v374, %v383
      %v391 = vmul.f32 %v375, %v388
      %v392 = vpack.c.bf16 %v390, %v390
      %v393 = vpack.c.bf16 %v391, %v391
      %v394 = vld [vmem:[#allocation13] sm:$0xf]
      %v395 = vld [vmem:[#allocation13 + $0x4] sm:$0xf]
      %v396 = vld [vmem:[#allocation13 + $0x8] sm:$0xf]
      %v397 = vld [vmem:[#allocation13 + $0xc] sm:$0xf]
      %v400 = vunpack.c.l.b16 %v394
      %v401 = vunpack.c.l.b16 %v395
      %v402 = vpack.c.b16 %v401, %v400
      %v405 = vsel %vm113, %v392, 0
      %407 = vmatprep.subr.bf16.mxu0 0
      %408 = vmatpush1.bf16.msra.mxu0 0
      %409 = vmatprep.subr.bf16.mxu0 0
      %410 = vmatpush1.bf16.msra.mxu0 0
      %411 = vmatprep.subr.bf16.mxu0 0
      %412 = vmatpush1.bf16.msra.mxu0 0
      %413 = vmatprep.subr.bf16.mxu0 0
      %414 = vmatpush1.bf16.msra.mxu0 0
      %415 = vmatprep.subr.bf16.mxu0 0
      %416 = vmatpush1.bf16.msra.mxu0 0
      %417 = vmatprep.subr.bf16.mxu0 0
      %418 = vmatpush1.bf16.msra.mxu0 0
      %419 = vmatprep.subr.bf16.mxu0 0
      %420 = vmatpush1.bf16.msra.mxu0 0
      %421 = vmatprep.subr.bf16.mxu0 0
      %422 = vmatpush1.bf16.msra.mxu0 %v402
      %423 = vmatprep.subr.bf16.mxu0 0
      %424 = vmatpush2.bf16.msra.mxu0 0
      %425 = vmatprep.subr.bf16.mxu0 0
      %426 = vmatpush2.bf16.msra.mxu0 0
      %427 = vmatprep.subr.bf16.mxu0 0
      %428 = vmatpush2.bf16.msra.mxu0 0
      %429 = vmatprep.subr.bf16.mxu0 0
      %430 = vmatpush2.bf16.msra.mxu0 0
      %431 = vmatprep.subr.bf16.mxu0 0
      %432 = vmatpush2.bf16.msra.mxu0 0
      %433 = vmatprep.subr.bf16.mxu0 0
      %434 = vmatpush2.bf16.msra.mxu0 0
      %435 = vmatprep.subr.bf16.mxu0 0
      %436 = vmatpush2.bf16.msra.mxu0 0
      %437 = vmatprep.subr.bf16.mxu0 0
      %438 = vmatpush2.bf16.msra.mxu0 0
      %439 = vmatprep.mubr.bf16.mxu0 0
      %440 = vmatmul.mubr.bf16.gmra.mxu0 %v405
      %v441 = vpop.f32.mrf.mxu0
      %v442 = vadd.f32 0.0, %v441
      %v443 = vpop.f32.mrf.mxu0
      %v444 = vpop.f32.mrf.mxu0
      %v445 = vpop.f32.mrf.mxu0
      %446 = vdwg.mxu0
      %v449 = vunpack.c.l.b16 %v396
      %v450 = vunpack.c.l.b16 %v397
      %v451 = vpack.c.b16 %v450, %v449
      %v454 = vsel %vm113, %v393, 0
      %456 = vmatprep.subr.bf16.mxu0 0
      %457 = vmatpush1.bf16.msra.mxu0 0
      %458 = vmatprep.subr.bf16.mxu0 0
      %459 = vmatpush1.bf16.msra.mxu0 0
      %460 = vmatprep.subr.bf16.mxu0 0
      %461 = vmatpush1.bf16.msra.mxu0 0
      %462 = vmatprep.subr.bf16.mxu0 0
      %463 = vmatpush1.bf16.msra.mxu0 0
      %464 = vmatprep.subr.bf16.mxu0 0
      %465 = vmatpush1.bf16.msra.mxu0 0
      %466 = vmatprep.subr.bf16.mxu0 0
      %467 = vmatpush1.bf16.msra.mxu0 0
      %468 = vmatprep.subr.bf16.mxu0 0
      %469 = vmatpush1.bf16.msra.mxu0 0
      %470 = vmatprep.subr.bf16.mxu0 0
      %471 = vmatpush1.bf16.msra.mxu0 %v451
      %472 = vmatprep.subr.bf16.mxu0 0
      %473 = vmatpush2.bf16.msra.mxu0 0
      %474 = vmatprep.subr.bf16.mxu0 0
      %475 = vmatpush2.bf16.msra.mxu0 0
      %476 = vmatprep.subr.bf16.mxu0 0
      %477 = vmatpush2.bf16.msra.mxu0 0
      %478 = vmatprep.subr.bf16.mxu0 0
      %479 = vmatpush2.bf16.msra.mxu0 0
      %480 = vmatprep.subr.bf16.mxu0 0
      %481 = vmatpush2.bf16.msra.mxu0 0
      %482 = vmatprep.subr.bf16.mxu0 0
      %483 = vmatpush2.bf16.msra.mxu0 0
      %484 = vmatprep.subr.bf16.mxu0 0
      %485 = vmatpush2.bf16.msra.mxu0 0
      %486 = vmatprep.subr.bf16.mxu0 0
      %487 = vmatpush2.bf16.msra.mxu0 0
      %488 = vmatprep.mubr.bf16.mxu0 0
      %489 = vmatmul.mubr.bf16.gmra.mxu0 %v454
      %v490 = vpop.f32.mrf.mxu0
      %v491 = vadd.f32 0.0, %v490
      %v492 = vpop.f32.mrf.mxu0
      %v493 = vpop.f32.mrf.mxu0
      %v494 = vpop.f32.mrf.mxu0
      %495 = vdwg.mxu0
      %v496 = vld [vmem:[#allocation11] sm:$0xff]
      %v497 = vld [vmem:[%s5] sm:$0x1]
      %v499 = vlaneseq
      %v500 = vshrl.u32 %v499, 7
      %v501 = vsub.s32 0, %v500
      %v502 = vrot.slane %v497, %v501
      %v504 = vadd.f32 %v496, %v502
      %vm505 = vcmask 261120
      %v506 = vsel %vm505, %v442, 0.0
      %v507 = vsel %vm505, %v491, 0.0
      %v508 = vadd.f32 %v506, %v507
      %v509 = vadd.f32 %v504, %v508
      %v510 = vsel %vm505, %v509, 0.0
      %511 = vadd.xlane.f32.xlu0 %v510
      %v512 = vpop.xlane.xlu0 %511
      %v513 = vrcp.pop 32.0
      %v514 = vmul.f32 %v512, %v513
      %v515 = vsub.f32 %v509, %v514
      %v516 = vmul.f32 %v515, %v515
      %v517 = vsel %vm505, %v516, 0.0
      %518 = vadd.xlane.f32.xlu0 %v517
      %v519 = vpop.xlane.xlu0 %518
      %v520 = vmul.f32 %v519, %v513
      %v521 = vadd.f32 %v520, 1e-05
      %v522 = vrsqrt.pop %v521
      %v523 = vmul.f32 %v515, %v522
      %v524 = vld [vmem:[%s6] sm:$0x1]
      %v526 = vlaneseq
      %v527 = vshrl.u32 %v526, 7
      %v528 = vsub.s32 0, %v527
      %v529 = vrot.slane %v524, %v528
      %v531 = vmul.f32 %v523, %v529
      %v532 = vld [vmem:[%s7] sm:$0x1]
      %v534 = vlaneseq
      %v535 = vshrl.u32 %v534, 7
      %v536 = vsub.s32 0, %v535
      %v537 = vrot.slane %v532, %v536
      %v539 = vadd.f32 %v531, %v537
      %540 = vst.msk [vmem:[#allocation14] sm:$0xff] %vm505, %v539
    $region61: #{tpu_custom_call.1} parent=1 // pred_fallthru
      _
    // Predicated region
    $region62: #{tpu_custom_call.1} parent=1 // pred_check
      _
    $region63: #{tpu_custom_call.1} parent=1 // pred_check_branch
      %542 = sbr.rel (0) target = $region65
    $region64: #{tpu_custom_call.1} parent=1 // pred_region
      %s544 = ssub.s32 128, 128
      %545 = vsyncadd [#allocation7], %s544
      %s547 = sshll.u32 [#allocation14], 4
      %s548 = int_to_ptr.vmem [resolvable:$true] %s547
      %550 = dma.vmem_to_hbm [thread:$0]  %s548, 128, %s8, [#allocation7]
    $region65: #{tpu_custom_call.1} parent=1 // pred_fallthru
      _
    // Predicated region
    $region66: #{tpu_custom_call.1} parent=1 // pred_check
      _
    $region67: #{tpu_custom_call.1} parent=1 // pred_check_branch
      %552 = sbr.rel (0) target = $region69
    $region68: #{tpu_custom_call.1} parent=1 // pred_region
      %553 = dma.done [#allocation7], 128
    $region69: #{tpu_custom_call.1} parent=1 // pred_fallthru
      _
    %554 = vsyncpa [#allocation6], 1
    %555 = vsyncpa [#allocation9], 1
    %556 = vsyncpa [#allocation12], 1
    %557 = vsyncpa [#allocation7], 1

</llo_original>
